<compile_context>
chip_gen: v5e
topology: v5e:2x2
jax: 0.10.0
libtpu: 0.0.40
codegen_flags: <defaults>
</compile_context>

<pallas_src>
import math

import jax
import jax.numpy as jnp
from jax.experimental import pallas as pl
from jax.experimental.pallas import tpu as pltpu


# fixed sizes from the module definition
A_SIZE = 512                          # appearance width  (4  * 128 lanes)
P_SIZE = 2048                         # pose width        (16 * 128 lanes)
K_SIZE = 60                           # keypoint encoder in/out (15 * 4)
KP_RAW = 45                           # raw flattened keypoints (15 * 3)
SMALL_W = 128                         # merged operand: [kp45 | 1 | 0*14 | PE60 | 0*8]
C_OUT = A_SIZE + P_SIZE + 2 * K_SIZE  # 2680 — true module output width


def _round_up(x, m):
    return (x + m - 1) // m * m


# ---------------------------------------------------------------------------
# plain-JAX glue: 1-D sin/cos positional encoding (same math as the torch ref)
# ---------------------------------------------------------------------------
def positionalencoding1d(d_model, length):
    if d_model % 2 != 0:
        raise ValueError("d_model must be even, got %d" % d_model)
    position = jnp.arange(length, dtype=jnp.float32)[:, None]
    div_term = jnp.exp(
        jnp.arange(0, d_model, 2, dtype=jnp.float32) * -(math.log(10000.0) / d_model))
    pe = jnp.zeros((length, d_model), dtype=jnp.float32)
    pe = pe.at[:, 0::2].set(jnp.sin(position * div_term))
    pe = pe.at[:, 1::2].set(jnp.cos(position * div_term))
    return pe


# ---------------------------------------------------------------------------
# fused Pallas kernel
# ---------------------------------------------------------------------------
def _make_fused_kernel(s0, s1, s2):
    # Scales are baked as Python floats (betas are static module config).
    # TODO(synk): if betas ever become traced values, pass them via an SMEM
    # scalar operand instead of baking, to avoid per-beta recompiles.
    def kernel(app_ref, pose_ref, small_ref, w_ref, o_ref):
        # appearance segment, lanes [0, 512): unmasked, lane-aligned store
        o_ref[:, :A_SIZE] = app_ref[...] * s0
        # pose segment, lanes [512, 2560): unmasked, lane-aligned store
        o_ref[:, A_SIZE:A_SIZE + P_SIZE] = pose_ref[...] * s1
        # key segment, lanes [2560, 2680):
        #   small = [kp_raw(45) | 1 | 0(14) | PE(60) | 0(8)]
        #   w_ref rows [0,45) = remapped kp weights (z summed), row 45 = bias,
        #   everything else 0  =>  mm lanes [0,60) = Linear(kp), [60,128) = 0.
        sm = small_ref[...]
        mm = jnp.dot(sm, w_ref[...], preferred_element_type=jnp.float32)
        lane = jax.lax.broadcasted_iota(jnp.int32, sm.shape, 1)
        key = mm + jnp.where(lane >= K_SIZE, sm, 0.0)   # add PE exactly (VPU)
        o_ref[:, A_SIZE + P_SIZE:] = key[:, :2 * K_SIZE] * s2
    return kernel


def fused_embed(app, pose, small, w_fold, scales, *,
                max_tile_rows=512, vmem_limit_bytes=48 * 1024 * 1024):
    """app:(N,512) pose:(N,2048) small:(N,128) w_fold:(128,128)
    -> (N, 2680) fused embedding (true output width, no padding)."""
    N = app.shape[0]
    n8 = _round_up(N, 8)
    if n8 != N:
        # at most 7 padded rows; keeps the edge sublane-aligned
        pad = lambda x: jnp.pad(x, ((0, n8 - N), (0, 0)))
        app, pose, small = pad(app), pad(pose), pad(small)

    # >=2 grid steps when possible (megacore on v7x), 8-aligned, <=512 rows.
    tile_rows = min(max_tile_rows, max(8, _round_up(pl.cdiv(n8, 2), 8)))
    grid = (pl.cdiv(n8, tile_rows),)

    kernel = _make_fused_kernel(*[float(s) for s in scales])
    out = pl.pallas_call(
        kernel,
        out_shape=jax.ShapeDtypeStruct((n8, C_OUT), jnp.float32),
        grid=grid,
        in_specs=[
            pl.BlockSpec((tile_rows, A_SIZE), lambda i: (i, 0)),
            pl.BlockSpec((tile_rows, P_SIZE), lambda i: (i, 0)),
            pl.BlockSpec((tile_rows, SMALL_W), lambda i: (i, 0)),
            pl.BlockSpec((SMALL_W, SMALL_W), lambda i: (0, 0)),   # weight resident
        ],
        out_specs=pl.BlockSpec((tile_rows, C_OUT), lambda i: (i, 0)),
        compiler_params=pltpu.CompilerParams(
            dimension_semantics=("parallel",),
            vmem_limit_bytes=vmem_limit_bytes),
    )(app, pose, small, w_fold)
    return out if n8 == N else out[:N]


# ---------------------------------------------------------------------------
# HMAR_tracker (Pallas version)
# ---------------------------------------------------------------------------
class HMARTrackerPallas:
    def __init__(self, mode="APK", betas=(1.0, 0.5, 2.0), seed=0):
        self.mode = mode
        self.A_size = A_SIZE
        self.P_size = P_SIZE
        self.K_size = K_SIZE
        self.betas = tuple(float(b) for b in betas)
        self.total_size = self.A_size + self.P_size + self.K_size * 2

        # deterministic init of the keypoint_encoder Linear (PyTorch default:
        # U(-1/sqrt(fan_in), 1/sqrt(fan_in)) for both weight and bias)
        key = jax.random.PRNGKey(seed)
        kw, kb = jax.random.split(key)
        bound = 1.0 / math.sqrt(self.K_size)
        self.kp_w = jax.random.uniform(kw, (K_SIZE, K_SIZE), jnp.float32, -bound, bound)
        self.kp_b = jax.random.uniform(kb, (K_SIZE,), jnp.float32, -bound, bound)

        # Fold the [x|y|z|z] duplication and the bias into one resident weight.
        # Raw kp lane r = 3*i + c (c: 0=x,1=y,2=z).  Linear out j:
        #   sum_i x_i W[j,i] + y_i W[j,15+i] + z_i (W[j,30+i]+W[j,45+i]) + b_j
        wx = self.kp_w[:, 0:15]
        wy = self.kp_w[:, 15:30]
        wz = self.kp_w[:, 30:45] + self.kp_w[:, 45:60]
        w_int = jnp.stack([wx, wy, wz], axis=-1).reshape(K_SIZE, KP_RAW)  # (60,45)
        w_fold = jnp.zeros((SMALL_W, SMALL_W), jnp.float32)
        w_fold = w_fold.at[:KP_RAW, :K_SIZE].set(w_int.T)     # kp mapping
        w_fold = w_fold.at[KP_RAW, :K_SIZE].set(self.kp_b)    # bias (driven by 1-lane)
        self.w_fold = w_fold

        # TODO(synk): RelationTransformerModel_APK is not defined in the source
        # module; it is treated as identity here rather than fabricating its
        # math.  The b^2 per-segment folding below is only valid under that
        # identity assumption.

    def forward(self, BS, T, P, embeddings, ids, bboxs, keypoints):
        A, Psz, K = self.A_size, self.P_size, self.K_size
        b0, b1, b2 = self.betas
        N = BS * T * P

        # ---- keypoint branch ('K' in mode): raw flatten (15,3)->(45,) is a
        # free reshape; duplication + bias live in the folded weight. ----
        kp45 = keypoints.reshape(N, KP_RAW).astype(jnp.float32)
        temporal = positionalencoding1d(K, T)                               # (T, 60)
        pe_tok = jnp.broadcast_to(
            temporal[None, :, None, :], (BS, T, P, K)).reshape(N, K)
        small = jnp.concatenate(
            [kp45,
             jnp.ones((N, 1), jnp.float32),                    # bias-driver lane 45
             jnp.zeros((N, K_SIZE - KP_RAW - 1), jnp.float32),
             pe_tok,                                           # lanes [60, 120)
             jnp.zeros((N, SMALL_W - 2 * K_SIZE), jnp.float32)], axis=-1)   # (N,128)

        # ---- id mask (plain JAX — too small to warrant a kernel launch) ----
        ids_x = ids.reshape(BS, T * P).astype(jnp.int32)
        mask_x = jnp.where(ids_x == -1, 0, 1).astype(jnp.int32)

        # ---- single fused, lane-dense embedding kernel ----
        # The (identity) relation transformer sits between the input-side and
        # output-side beta scalings, so the scales compose to b^2 per segment.
        app = embeddings[1].reshape(N, A).astype(jnp.float32)
        pose = embeddings[0].reshape(N, Psz).astype(jnp.float32)
        fused = fused_embed(app, pose, small, self.w_fold,
                            (b0 * b0, b1 * b1, b2 * b2))       # (N, 2680)
        output_embeddings = fused.reshape(BS, T * P, C_OUT)    # free reshape

        output = {
            "output_embeddings": output_embeddings,   # (BS, T*P, 2680)
            "ids": ids_x,                             # (BS, T*P)
            "mask": mask_x,                           # (BS, T*P)
        }
        return output, 0


# ---------------------------------------------------------------------------
# main
# ---------------------------------------------------------------------------
if __name__ == "__main__":
    BS, T, P = 2, 4, 3   # small token counts; feature widths fixed by the module

    rng = jax.random.PRNGKey(0)
    k1, k2, k3, k4, k5 = jax.random.split(rng, 5)

    pose_emb = jax.random.normal(k1, (BS, T, P, P_SIZE), jnp.float32)  # embeddings[0]
    app_emb = jax.random.normal(k2, (BS, T, P, A_SIZE), jnp.float32)   # embeddings[1]
    keypoints = jax.random.normal(k3, (BS, T, P, 15, 3), jnp.float32)
    bboxs = jax.random.normal(k4, (BS, T, P, 4), jnp.float32)
    ids = jax.random.randint(k5, (BS, T, P), -1, 5, jnp.int32)         # some -1 entries

    betas = (1.0, 0.5, 2.0)
    tracker = HMARTrackerPallas(mode="APK", betas=betas, seed=0)
    out, loss = tracker.forward(BS, T, P, [pose_emb, app_emb], ids, bboxs, keypoints)

    emb = jax.block_until_ready(out["output_embeddings"])
    jax.block_until_ready(out["mask"])
    jax.block_until_ready(out["ids"])

    assert emb.shape == (BS, T * P, C_OUT)
    assert out["mask"].shape == (BS, T * P)
    assert out["ids"].shape == (BS, T * P)

    # numeric check against a plain-JAX reference (identity transformer,
    # betas applied on both input and output sides -> b^2 per segment).
    b0, b1, b2 = betas
    ref_app = app_emb.reshape(BS, T * P, A_SIZE) * (b0 * b0)
    ref_pose = pose_emb.reshape(BS, T * P, P_SIZE) * (b1 * b1)
    assert jnp.allclose(emb[:, :, :A_SIZE], ref_app, rtol=1e-5, atol=1e-5)
    assert jnp.allclose(emb[:, :, A_SIZE:A_SIZE + P_SIZE], ref_pose,
                        rtol=1e-5, atol=1e-5)

    kp3 = jnp.concatenate([keypoints[..., 0], keypoints[..., 1],
                           keypoints[..., 2], keypoints[..., 2]], axis=-1)
    kp_flat = kp3.reshape(BS * T * P, K_SIZE)
    ref_kemb = kp_flat @ tracker.kp_w.T + tracker.kp_b
    pe = positionalencoding1d(K_SIZE, T)
    pe_tok = jnp.broadcast_to(
        pe[None, :, None, :], (BS, T, P, K_SIZE)).reshape(BS * T * P, K_SIZE)
    ref_key = (jnp.concatenate([ref_kemb, pe_tok], axis=-1) * (b2 * b2)
               ).reshape(BS, T * P, 2 * K_SIZE)
    # MXU-precision tolerance on the Linear part
    assert jnp.allclose(emb[:, :, A_SIZE + P_SIZE:], ref_key, rtol=3e-2, atol=3e-2)
    # PE part is added on the VPU (exact) — tight tolerance
    assert jnp.allclose(emb[:, :, A_SIZE + P_SIZE + K_SIZE:],
                        ref_key[:, :, K_SIZE:], rtol=1e-4, atol=1e-4)

    print("KERNEL_OK")
</pallas_src>

<mosaic_0001>
module attributes {stable_mosaic.version = 11 : i64} {
  func.func @kernel(%arg0: i32, %arg1: memref<16x512xf32, #tpu.memory_space<vmem>>, %arg2: memref<16x2048xf32, #tpu.memory_space<vmem>>, %arg3: memref<16x128xf32, #tpu.memory_space<vmem>>, %arg4: memref<128x128xf32, #tpu.memory_space<vmem>>, %arg5: memref<16x2680xf32, #tpu.memory_space<vmem>>) attributes {dimension_semantics = [#tpu.dimension_semantics<parallel>], iteration_bounds = array<i64: 2>, scalar_prefetch = 0 : i64, scratch_operands = 0 : i64, tpu.core_type = #tpu.core_type<tc>, window_params = [{transform_indices = @transform_0, window_bounds = array<i64: 16, 512>}, {transform_indices = @transform_1, window_bounds = array<i64: 16, 2048>}, {transform_indices = @transform_2, window_bounds = array<i64: 16, 128>}, {pipeline_mode = #tpu.pipeline_mode<synchronous>, transform_indices = @transform_3, window_bounds = array<i64: 128, 128>}, {transform_indices = @transform_4, window_bounds = array<i64: 16, 2680>}]} {
    %c0 = arith.constant 0 : index
    %c0_0 = arith.constant 0 : index
    %0 = vector.load %arg1[%c0, %c0_0] : memref<16x512xf32, #tpu.memory_space<vmem>>, vector<16x512xf32>
    %cst = arith.constant 1.000000e+00 : f32
    %1 = vector.broadcast %cst : f32 to vector<16x512xf32>
    %2 = arith.mulf %0, %1 : vector<16x512xf32>
    %c0_1 = arith.constant 0 : index
    %c0_2 = arith.constant 0 : index
    %3 = vector.load %arg5[%c0_1, %c0_2] : memref<16x2680xf32, #tpu.memory_space<vmem>>, vector<16x512xf32>
    tpu.vector_store %arg5[%c0_1, %c0_2], %2 {strides = array<i32>} : memref<16x2680xf32, #tpu.memory_space<vmem>>, vector<16x512xf32>,
    %c0_3 = arith.constant 0 : index
    %c0_4 = arith.constant 0 : index
    %4 = vector.load %arg2[%c0_3, %c0_4] : memref<16x2048xf32, #tpu.memory_space<vmem>>, vector<16x2048xf32>
    %cst_5 = arith.constant 2.500000e-01 : f32
    %5 = vector.broadcast %cst_5 : f32 to vector<16x2048xf32>
    %6 = arith.mulf %4, %5 : vector<16x2048xf32>
    %c0_6 = arith.constant 0 : index
    %c512 = arith.constant 512 : index
    %7 = vector.load %arg5[%c0_6, %c512] : memref<16x2680xf32, #tpu.memory_space<vmem>>, vector<16x2048xf32>
    tpu.vector_store %arg5[%c0_6, %c512], %6 {strides = array<i32>} : memref<16x2680xf32, #tpu.memory_space<vmem>>, vector<16x2048xf32>,
    %c0_7 = arith.constant 0 : index
    %c0_8 = arith.constant 0 : index
    %8 = vector.load %arg3[%c0_7, %c0_8] : memref<16x128xf32, #tpu.memory_space<vmem>>, vector<16x128xf32>
    %c0_9 = arith.constant 0 : index
    %c0_10 = arith.constant 0 : index
    %9 = vector.load %arg4[%c0_9, %c0_10] : memref<128x128xf32, #tpu.memory_space<vmem>>, vector<128x128xf32>
    %cst_11 = arith.constant dense<0.000000e+00> : vector<16x128xf32>
    %10 = tpu.matmul %8, %9, %cst_11 {dimension_numbers = #tpu.dot_dimension_numbers<[1], [0], [0], [1], [0, 0, 1, 1], [], []>} : vector<16x128xf32>, vector<128x128xf32>, vector<16x128xf32> -> vector<16x128xf32>
    %11 = tpu.iota {dimensions = array<i32: 1>} : vector<16x128xi32>
    %c60_i32 = arith.constant 60 : i32
    %12 = vector.broadcast %c60_i32 : i32 to vector<16x128xi32>
    %13 = arith.cmpi sge, %11, %12 : vector<16x128xi32>
    %cst_12 = arith.constant 0.000000e+00 : f32
    %14 = vector.broadcast %cst_12 : f32 to vector<16x128xf32>
    %15 = arith.select %13, %8, %14 : vector<16x128xi1>, vector<16x128xf32>
    %16 = arith.addf %10, %15 : vector<16x128xf32>
    %17 = vector.extract_strided_slice %16 {offsets = [0, 0], sizes = [16, 120], strides = [1, 1]} : vector<16x128xf32> to vector<16x120xf32>
    %cst_13 = arith.constant 4.000000e+00 : f32
    %18 = vector.broadcast %cst_13 : f32 to vector<16x120xf32>
    %19 = arith.mulf %17, %18 : vector<16x120xf32>
    %c0_14 = arith.constant 0 : index
    %c2560 = arith.constant 2560 : index
    %20 = vector.load %arg5[%c0_14, %c2560] : memref<16x2680xf32, #tpu.memory_space<vmem>>, vector<16x120xf32>
    tpu.vector_store %arg5[%c0_14, %c2560], %19 {strides = array<i32>} : memref<16x2680xf32, #tpu.memory_space<vmem>>, vector<16x120xf32>,
    return
  }
  func.func @transform_0(%arg0: i32) -> (i32, i32) {
    %c0_i32 = arith.constant 0 : i32
    %c0_i32_0 = arith.constant 0 : i32
    return %arg0, %c0_i32 : i32, i32
  }
  func.func @transform_1(%arg0: i32) -> (i32, i32) {
    %c0_i32 = arith.constant 0 : i32
    %c0_i32_0 = arith.constant 0 : i32
    return %arg0, %c0_i32 : i32, i32
  }
  func.func @transform_2(%arg0: i32) -> (i32, i32) {
    %c0_i32 = arith.constant 0 : i32
    %c0_i32_0 = arith.constant 0 : i32
    return %arg0, %c0_i32 : i32, i32
  }
  func.func @transform_3(%arg0: i32) -> (i32, i32) {
    %c0_i32 = arith.constant 0 : i32
    %c0_i32_0 = arith.constant 0 : i32
    %c0_i32_1 = arith.constant 0 : i32
    return %c0_i32, %c0_i32_0 : i32, i32
  }
  func.func @transform_4(%arg0: i32) -> (i32, i32) {
    %c0_i32 = arith.constant 0 : i32
    %c0_i32_0 = arith.constant 0 : i32
    return %arg0, %c0_i32 : i32, i32
  }
}

</mosaic_0001>

<llo_original>
// kernel: tpu_custom_call.1
$region0: #{tpu_custom_call.1}
  #allocation0 [shape = 'u32[]', space=smem, size = 0x4, offset = 0x4, fixed_abs, tag = 'smem constant byte address 0x4 - core index']
  #allocation1 [shape = 'u32[72,128]{1,0:T(1,128)}', space=vmem, size = 0x9000, scoped, tag = 'internal scratch']
  %s0 = inlined_call_operand.hbm [shape: f32[24,512], index: 0, kind: input, shape index: {}]
  %s1 = inlined_call_operand.hbm [shape: f32[24,2048], index: 1, kind: input, shape index: {}]
  %s2 = inlined_call_operand.hbm [shape: f32[24,128], index: 2, kind: input, shape index: {}]
  %s3 = inlined_call_operand.hbm [shape: f32[128,128], index: 3, kind: input, shape index: {}]
  %s4 = inlined_call_operand.hbm [shape: f32[24,2680], index: 4, kind: output, shape index: {}]
  %s5 = sld [smem:[#allocation0]]
  $region65: #{tpu_custom_call.1} parent=0
    _
  %s7 = ssub.s32 1, %s5
  %s8 = scalar_select 0, %s7, %s5
  $region1: #{tpu_custom_call.1} parent=0
    #allocation2 [shape = 'u8[65536]{0}', space=vmem, size = 0x10000, scoped, tag = 'input window, operand 0']
    #allocation3 [shape = 's32[2]{0}', space=sflag, size = 0x8, scoped, tag = 'scoped memory for tpu_custom_call.1']
    #allocation4 [shape = 's32[2]{0}', space=sflag, size = 0x8, scoped, tag = 'scoped memory for tpu_custom_call.1']
    #allocation5 [shape = 'u8[262144]{0}', space=vmem, size = 0x40000, scoped, tag = 'input window, operand 1']
    #allocation6 [shape = 's32[2]{0}', space=sflag, size = 0x8, scoped, tag = 'scoped memory for tpu_custom_call.1']
    #allocation7 [shape = 'u8[16384]{0}', space=vmem, size = 0x4000, scoped, tag = 'input window, operand 2']
    #allocation8 [shape = 'u8[65536]{0}', space=vmem, size = 0x10000, scoped, tag = 'input window, operand 3, single buffered']
    #allocation9 [shape = 's32[1]{0}', space=sflag, size = 0x4, scoped, tag = 'scoped memory for tpu_custom_call.1']
    #allocation10 [shape = 'u8[344064]{0}', space=vmem, size = 0x54000, scoped, tag = 'output window, operand 0']
    %9 = vsyncpa [#allocation3], 0
    %s10 = scalar_lea.sflag [#allocation3], 1
    %11 = vsyncpa %s10, 0
    %12 = vsyncpa [#allocation6], 0
    %s13 = scalar_lea.sflag [#allocation6], 1
    %14 = vsyncpa %s13, 0
    %15 = vsyncpa [#allocation9], 0
    %16 = vsyncpa [#allocation4], 0
    %s17 = scalar_lea.sflag [#allocation4], 1
    %18 = vsyncpa %s17, 0
    loop: start=0, step=1, limit=4
    $region2: #{tpu_custom_call.1} parent=1 // loop_pre_header
      _
    $region3: #{tpu_custom_call.1} parent=1 // loop_header
      %s20 = sphi 0, %s24
      %p21 = scmp.ge.s32.totalorder %s20, 4
      %s30 = sphi 0, %s32
      %s33 = sphi 0, %s30
      %s34 = sphi 0, %s33
      %s50 = sphi 0, %s34
      %s56 = sphi 0, %s58
      %s59 = sphi 0, %s56
      %s60 = sphi 0, %s59
      %s76 = sphi 0, %s60
      %s82 = sphi 0, %s84
      %s85 = sphi 0, %s82
      %s86 = sphi 0, %s85
      %s102 = sphi 0, %s86
      %s106 = sphi 0, %s106
      %s108 = sphi 0, %s106
      %s109 = sphi 0, %s108
      %s123 = sphi 0, %s109
      %s129 = sphi 0, %s131
      %s132 = sphi 0, %s129
      %s133 = sphi 0, %s132
      %s149 = sphi 0, %s133
    $region4: #{tpu_custom_call.1} parent=1 // loop_header_branch
      %23 = sbr.rel (%p21) target = $region8
    $region5: #{tpu_custom_call.1} parent=1 // loop_body
      %s25 = ssub.s32 %s20, 1
      %s26 = ssub.s32 %s20, 2
      %s27 = sadd.s32 %s20, 1
      %s28 = ssub.s32 %s20, %s27
      %p29 = scmp.eq.s32.totalorder %s28, 0
      %s31 = sadd.s32 %s30, 1
      %s32 = scalar_select %p29, %s30, %s31
      %p35 = pneg %p29
      %p36 = scmp.eq.s32.totalorder %s20, 1
      %p37 = por %p35, %p36
      %p38 = scmp.ne.s32.totalorder %s30, %s33
      %p39 = scmp.eq.s32.totalorder %s20, 0
      %p40 = por %p38, %p39
      %p41 = scmp.ne.s32.totalorder %s30, %s33
      %p42 = scmp.eq.s32.totalorder %s25, 1
      %p43 = por %p41, %p42
      %p44 = scmp.ne.s32.totalorder %s33, %s34
      %p45 = scmp.eq.s32.totalorder %s25, 0
      %p46 = por %p44, %p45
      %p47 = scmp.ne.s32.totalorder %s33, %s34
      %p48 = scmp.eq.s32.totalorder %s26, 1
      %p49 = por %p47, %p48
      %p51 = scmp.ne.s32.totalorder %s34, %s50
      %p52 = scmp.eq.s32.totalorder %s26, 0
      %p53 = por %p51, %p52
      %s54 = ssub.s32 %s20, %s27
      %p55 = scmp.eq.s32.totalorder %s54, 0
      %s57 = sadd.s32 %s56, 1
      %s58 = scalar_select %p55, %s56, %s57
      %p61 = pneg %p55
      %p62 = scmp.eq.s32.totalorder %s20, 1
      %p63 = por %p61, %p62
      %p64 = scmp.ne.s32.totalorder %s56, %s59
      %p65 = scmp.eq.s32.totalorder %s20, 0
      %p66 = por %p64, %p65
      %p67 = scmp.ne.s32.totalorder %s56, %s59
      %p68 = scmp.eq.s32.totalorder %s25, 1
      %p69 = por %p67, %p68
      %p70 = scmp.ne.s32.totalorder %s59, %s60
      %p71 = scmp.eq.s32.totalorder %s25, 0
      %p72 = por %p70, %p71
      %p73 = scmp.ne.s32.totalorder %s59, %s60
      %p74 = scmp.eq.s32.totalorder %s26, 1
      %p75 = por %p73, %p74
      %p77 = scmp.ne.s32.totalorder %s60, %s76
      %p78 = scmp.eq.s32.totalorder %s26, 0
      %p79 = por %p77, %p78
      %s80 = ssub.s32 %s20, %s27
      %p81 = scmp.eq.s32.totalorder %s80, 0
      %s83 = sadd.s32 %s82, 1
      %s84 = scalar_select %p81, %s82, %s83
      %p87 = pneg %p81
      %p88 = scmp.eq.s32.totalorder %s20, 1
      %p89 = por %p87, %p88
      %p90 = scmp.ne.s32.totalorder %s82, %s85
      %p91 = scmp.eq.s32.totalorder %s20, 0
      %p92 = por %p90, %p91
      %p93 = scmp.ne.s32.totalorder %s82, %s85
      %p94 = scmp.eq.s32.totalorder %s25, 1
      %p95 = por %p93, %p94
      %p96 = scmp.ne.s32.totalorder %s85, %s86
      %p97 = scmp.eq.s32.totalorder %s25, 0
      %p98 = por %p96, %p97
      %p99 = scmp.ne.s32.totalorder %s85, %s86
      %p100 = scmp.eq.s32.totalorder %s26, 1
      %p101 = por %p99, %p100
      %p103 = scmp.ne.s32.totalorder %s86, %s102
      %p104 = scmp.eq.s32.totalorder %s26, 0
      %p105 = por %p103, %p104
      %s107 = sadd.s32 %s106, 1
      %p110 = scmp.eq.s32.totalorder %s20, 1
      %p111 = scmp.ne.s32.totalorder %s106, %s108
      %p112 = scmp.eq.s32.totalorder %s20, 0
      %p113 = por %p111, %p112
      %p114 = scmp.ne.s32.totalorder %s106, %s108
      %p115 = scmp.eq.s32.totalorder %s25, 1
      %p116 = por %p114, %p115
      %p117 = scmp.ne.s32.totalorder %s108, %s109
      %p118 = scmp.eq.s32.totalorder %s25, 0
      %p119 = por %p117, %p118
      %p120 = scmp.ne.s32.totalorder %s108, %s109
      %p121 = scmp.eq.s32.totalorder %s26, 1
      %p122 = por %p120, %p121
      %p124 = scmp.ne.s32.totalorder %s109, %s123
      %p125 = scmp.eq.s32.totalorder %s26, 0
      %p126 = por %p124, %p125
      %s127 = ssub.s32 %s20, %s27
      %p128 = scmp.eq.s32.totalorder %s127, 0
      %s130 = sadd.s32 %s129, 1
      %s131 = scalar_select %p128, %s129, %s130
      %p134 = pneg %p128
      %p135 = scmp.eq.s32.totalorder %s20, 1
      %p136 = por %p134, %p135
      %p137 = scmp.ne.s32.totalorder %s129, %s132
      %p138 = scmp.eq.s32.totalorder %s20, 0
      %p139 = por %p137, %p138
      %p140 = scmp.ne.s32.totalorder %s129, %s132
      %p141 = scmp.eq.s32.totalorder %s25, 1
      %p142 = por %p140, %p141
      %p143 = scmp.ne.s32.totalorder %s132, %s133
      %p144 = scmp.eq.s32.totalorder %s25, 0
      %p145 = por %p143, %p144
      %p146 = scmp.ne.s32.totalorder %s132, %s133
      %p147 = scmp.eq.s32.totalorder %s26, 1
      %p148 = por %p146, %p147
      %p150 = scmp.ne.s32.totalorder %s133, %s149
      %p151 = scmp.eq.s32.totalorder %s26, 0
      %p152 = por %p150, %p151
      %p153 = scmp.le.s32.totalorder 1, %s20
      %p154 = scmp.lt.s32.totalorder %s20, 3
      %p155 = pnand %p153, %p154
      %p156 = pneg %p155
      // Predicated region
      $region9: #{tpu_custom_call.1} parent=5 // pred_check
        _
      $region10: #{tpu_custom_call.1} parent=5 // pred_check_branch
        %158 = sbr.rel (%p155) target = $region12
      $region11: #{tpu_custom_call.1} parent=5 // pred_region
        %s159 = ssub.s32 %s20, 1
        // Predicated region
        $region13: #{tpu_custom_call.1} parent=11 // pred_check
          %p160 = pneg %p119
        $region14: #{tpu_custom_call.1} parent=11 // pred_check_branch
          %162 = sbr.rel (%p160) target = $region16
        $region15: #{tpu_custom_call.1} parent=11 // pred_region
          %164 = vsyncadd [#allocation9], 0
          %s165 = sshll.u32 %s3, 4
          %s166 = int_to_ptr.hbm [resolvable:$true] %s165
          %s167 = sshll.u32 [#allocation8], 4
          %s168 = int_to_ptr.vmem [resolvable:$true] %s167
          %173 = dma.hbm_to_vmem [thread:$0]  %s166, 2048, %s168, [#allocation9], 128, 128, 8
        $region16: #{tpu_custom_call.1} parent=11 // pred_fallthru
          _
      $region12: #{tpu_custom_call.1} parent=5 // pred_fallthru
        _
      %p174 = scmp.lt.s32.totalorder %s20, 2
      // Predicated region
      $region17: #{tpu_custom_call.1} parent=5 // pred_check
        %p175 = pneg %p174
      $region18: #{tpu_custom_call.1} parent=5 // pred_check_branch
        %177 = sbr.rel (%p175) target = $region20
      $region19: #{tpu_custom_call.1} parent=5 // pred_region
        // Predicated region
        $region21: #{tpu_custom_call.1} parent=19 // pred_check
          %p178 = pneg %p40
        $region22: #{tpu_custom_call.1} parent=19 // pred_check_branch
          %180 = sbr.rel (%p178) target = $region24
        $region23: #{tpu_custom_call.1} parent=19 // pred_region
          %s181 = sand.u32 %s30, 1
          %s182 = scalar_lea.sflag [#allocation3], %s181
          %s183 = sand.u32 %s30, 1
          %s184 = smul.addr %s183, 64
          %s185 = scalar_lea.vmem [#allocation2], %s184
          %s186 = smul.u32 2, %s20
          %s187 = ssub.s32 3, %s186
          %p188 = scmp.lt.s32.totalorder %s187, 2
          %s189 = scalar_select %p188, %s187, 2
          %s190 = smul.u32 8, %s189
          %s191 = smul.u32 %s190, 4
          %s192 = ssub.s32 64, %s191
          %s193 = sshll.u32 %s192, 4
          %194 = vsyncadd %s182, %s193
          %p195 = scmp.ne.s32.totalorder 0, %s191
          %s196 = smul.addr %s186, 4
          %s197 = smul.addr %s196, 8
          %s198 = scalar_lea.hbm %s0, %s197
          %s199 = smul.u32 32, %s189
          %s200 = sshll.u32 %s198, 4
          %s201 = int_to_ptr.hbm [resolvable:$true] %s200
          %s202 = sshll.u32 %s185, 4
          %s203 = int_to_ptr.vmem [resolvable:$true] %s202
          %s204 = sshll.u32 %s199, 4
          %208 = dma.hbm_to_vmem [thread:$0]  (%p195), %s201, %s204, %s203, %s182, 512, 512, 32
        $region24: #{tpu_custom_call.1} parent=19 // pred_fallthru
          _
        // Predicated region
        $region25: #{tpu_custom_call.1} parent=19 // pred_check
          %p209 = pneg %p66
        $region26: #{tpu_custom_call.1} parent=19 // pred_check_branch
          %211 = sbr.rel (%p209) target = $region28
        $region27: #{tpu_custom_call.1} parent=19 // pred_region
          %s212 = sand.u32 %s20, 1
          %s213 = scalar_lea.sflag [#allocation6], %s212
          %s214 = sand.u32 %s56, 1
          %s215 = smul.addr %s214, 256
          %s216 = scalar_lea.vmem [#allocation5], %s215
          %s217 = smul.u32 2, %s20
          %s218 = ssub.s32 3, %s217
          %p219 = scmp.lt.s32.totalorder %s218, 2
          %s220 = scalar_select %p219, %s218, 2
          %s221 = smul.u32 8, %s220
          %s222 = smul.u32 %s221, 16
          %s223 = ssub.s32 256, %s222
          %s224 = sshll.u32 %s223, 4
          %225 = vsyncadd %s213, %s224
          %p226 = scmp.ne.s32.totalorder 0, %s222
          %s227 = smul.addr %s217, 16
          %s228 = smul.addr %s227, 8
          %s229 = scalar_lea.hbm %s1, %s228
          %s230 = smul.u32 128, %s220
          %s231 = sshll.u32 %s229, 4
          %s232 = int_to_ptr.hbm [resolvable:$true] %s231
          %s233 = sshll.u32 %s216, 4
          %s234 = int_to_ptr.vmem [resolvable:$true] %s233
          %s235 = sshll.u32 %s230, 4
          %239 = dma.hbm_to_vmem [thread:$0]  (%p226), %s232, %s235, %s234, %s213, 2048, 2048, 128
        $region28: #{tpu_custom_call.1} parent=19 // pred_fallthru
          _
        // Predicated region
        $region29: #{tpu_custom_call.1} parent=19 // pred_check
          %p240 = pneg %p92
        $region30: #{tpu_custom_call.1} parent=19 // pred_check_branch
          %242 = sbr.rel (%p240) target = $region32
        $region31: #{tpu_custom_call.1} parent=19 // pred_region
          %s243 = sand.u32 %s20, 1
          %s244 = scalar_lea.sflag [#allocation6], %s243
          %s245 = sand.u32 %s82, 1
          %s246 = smul.addr %s245, 16
          %s247 = scalar_lea.vmem [#allocation7], %s246
          %s248 = smul.u32 2, %s20
          %s249 = ssub.s32 3, %s248
          %p250 = scmp.lt.s32.totalorder %s249, 2
          %s251 = scalar_select %p250, %s249, 2
          %s252 = smul.u32 8, %s251
          %s253 = ssub.s32 16, %s252
          %s254 = sshll.u32 %s253, 4
          %255 = vsyncadd %s244, %s254
          %p256 = scmp.ne.s32.totalorder 0, %s252
          %s257 = smul.addr %s248, 8
          %s258 = scalar_lea.hbm %s2, %s257
          %s259 = smul.u32 8, %s251
          %s260 = sshll.u32 %s258, 4
          %s261 = int_to_ptr.hbm [resolvable:$true] %s260
          %s262 = sshll.u32 %s247, 4
          %s263 = int_to_ptr.vmem [resolvable:$true] %s262
          %s264 = sshll.u32 %s259, 4
          %268 = dma.hbm_to_vmem [thread:$0]  (%p256), %s261, %s264, %s263, %s244, 128, 128, 8
        $region32: #{tpu_custom_call.1} parent=19 // pred_fallthru
          _
      $region20: #{tpu_custom_call.1} parent=5 // pred_fallthru
        _
      %p269 = scmp.le.s32.totalorder 1, %s20
      %p270 = scmp.lt.s32.totalorder %s20, 3
      %p271 = pnand %p269, %p270
      %p272 = pneg %p271
      // Predicated region
      $region33: #{tpu_custom_call.1} parent=5 // pred_check
        _
      $region34: #{tpu_custom_call.1} parent=5 // pred_check_branch
        %274 = sbr.rel (%p271) target = $region36
      $region35: #{tpu_custom_call.1} parent=5 // pred_region
        %s275 = ssub.s32 %s20, 1
        %s276 = sand.u32 %s33, 1
        %s277 = scalar_lea.sflag [#allocation3], %s276
        %s278 = sand.u32 %s33, 1
        %s279 = smul.addr %s278, 64
        %s280 = scalar_lea.vmem [#allocation2], %s279
        // Predicated region
        $region37: #{tpu_custom_call.1} parent=35 // pred_check
          %p281 = pneg %p46
        $region38: #{tpu_custom_call.1} parent=35 // pred_check_branch
          %283 = sbr.rel (%p281) target = $region40
        $region39: #{tpu_custom_call.1} parent=35 // pred_region
          %285 = dma.done %s277, 1024
        $region40: #{tpu_custom_call.1} parent=35 // pred_fallthru
          _
        %s286 = sand.u32 %s25, 1
        %s287 = scalar_lea.sflag [#allocation6], %s286
        %s288 = sand.u32 %s59, 1
        %s289 = smul.addr %s288, 256
        %s290 = scalar_lea.vmem [#allocation5], %s289
        // Predicated region
        $region41: #{tpu_custom_call.1} parent=35 // pred_check
          %p291 = pneg %p72
        $region42: #{tpu_custom_call.1} parent=35 // pred_check_branch
          %293 = sbr.rel (%p291) target = $region44
        $region43: #{tpu_custom_call.1} parent=35 // pred_region
          %295 = dma.done %s287, 4096
        $region44: #{tpu_custom_call.1} parent=35 // pred_fallthru
          _
        %s296 = sand.u32 %s25, 1
        %s297 = scalar_lea.sflag [#allocation6], %s296
        %s298 = sand.u32 %s85, 1
        %s299 = smul.addr %s298, 16
        %s300 = scalar_lea.vmem [#allocation7], %s299
        // Predicated region
        $region45: #{tpu_custom_call.1} parent=35 // pred_check
          %p301 = pneg %p98
        $region46: #{tpu_custom_call.1} parent=35 // pred_check_branch
          %303 = sbr.rel (%p301) target = $region48
        $region47: #{tpu_custom_call.1} parent=35 // pred_region
          %305 = dma.done %s297, 256
        $region48: #{tpu_custom_call.1} parent=35 // pred_fallthru
          _
        // Predicated region
        $region49: #{tpu_custom_call.1} parent=35 // pred_check
          %p306 = pneg %p119
        $region50: #{tpu_custom_call.1} parent=35 // pred_check_branch
          %308 = sbr.rel (%p306) target = $region52
        $region51: #{tpu_custom_call.1} parent=35 // pred_region
          %310 = dma.done [#allocation9], 2048
        $region52: #{tpu_custom_call.1} parent=35 // pred_fallthru
          _
        %s311 = sand.u32 %s33, 1
        %s312 = scalar_lea.sflag [#allocation3], %s311
        %s313 = sand.u32 %s33, 1
        %s314 = smul.addr %s313, 64
        %s315 = scalar_lea.vmem [#allocation2], %s314
        %p316 = pneg %p46
        %p317 = pneg %p43
        %s318 = sand.u32 %s25, 1
        %s319 = scalar_lea.sflag [#allocation6], %s318
        %s320 = sand.u32 %s59, 1
        %s321 = smul.addr %s320, 256
        %s322 = scalar_lea.vmem [#allocation5], %s321
        %p323 = pneg %p72
        %p324 = pneg %p69
        %s325 = sand.u32 %s25, 1
        %s326 = scalar_lea.sflag [#allocation6], %s325
        %s327 = sand.u32 %s85, 1
        %s328 = smul.addr %s327, 16
        %s329 = scalar_lea.vmem [#allocation7], %s328
        %p330 = pneg %p98
        %p331 = pneg %p95
        %p332 = pneg %p119
        %p333 = pneg %p116
        %p334 = pneg %p145
        %p335 = pneg %p142
        %s336 = sand.u32 %s132, 1
        %s337 = scalar_lea.sflag [#allocation4], %s336
        %s338 = sand.u32 %s132, 1
        %s339 = smul.addr %s338, 336
        %s340 = scalar_lea.vmem [#allocation10], %s339
        %s341 = smul.u32 2, %s25
        %s342 = ssub.s32 3, %s341
        %p343 = scmp.lt.s32.totalorder %s342, 2
        %s344 = scalar_select %p343, %s342, 2
        %s345 = smul.u32 8, %s344
        %s346 = smul.u32 %s345, 4
        %s347 = smul.u32 2, %s25
        %s348 = ssub.s32 3, %s347
        %p349 = scmp.lt.s32.totalorder %s348, 2
        %s350 = scalar_select %p349, %s348, 2
        %s351 = smul.u32 8, %s350
        %s352 = smul.u32 %s351, 16
        %s353 = smul.u32 2, %s25
        %s354 = ssub.s32 3, %s353
        %p355 = scmp.lt.s32.totalorder %s354, 2
        %s356 = scalar_select %p355, %s354, 2
        %s357 = smul.u32 8, %s356
        %s358 = smul.u32 2, %s25
        %s359 = ssub.s32 3, %s358
        %p360 = scmp.lt.s32.totalorder %s359, 2
        %s361 = scalar_select %p360, %s359, 2
        %s362 = smul.u32 8, %s361
        %s363 = smul.u32 %s362, 21
        %v364 = vld [vmem:[%s280] sm:$0xff]
        %v365 = vld [vmem:[%s280 + $0x8] sm:$0xff]
        %v366 = vld [vmem:[%s280 + $0x10] sm:$0xff]
        %v367 = vld [vmem:[%s280 + $0x18] sm:$0xff]
        %v368 = vld [vmem:[%s280 + $0x20] sm:$0xff]
        %v369 = vld [vmem:[%s280 + $0x28] sm:$0xff]
        %v370 = vld [vmem:[%s280 + $0x30] sm:$0xff]
        %v371 = vld [vmem:[%s280 + $0x38] sm:$0xff]
        %372 = vst [vmem:[%s340] sm:$0xff] %v364
        %373 = vst [vmem:[%s340 + $0x8] sm:$0xff] %v365
        %374 = vst [vmem:[%s340 + $0x10] sm:$0xff] %v366
        %375 = vst [vmem:[%s340 + $0x18] sm:$0xff] %v367
        %376 = vst [vmem:[%s340 + $0xa8] sm:$0xff] %v368
        %377 = vst [vmem:[%s340 + $0xb0] sm:$0xff] %v369
        %378 = vst [vmem:[%s340 + $0xb8] sm:$0xff] %v370
        %379 = vst [vmem:[%s340 + $0xc0] sm:$0xff] %v371
        %v380 = vld [vmem:[%s290] sm:$0xff]
        %v381 = vld [vmem:[%s290 + $0x8] sm:$0xff]
        %v382 = vld [vmem:[%s290 + $0x10] sm:$0xff]
        %v383 = vld [vmem:[%s290 + $0x18] sm:$0xff]
        %v384 = vld [vmem:[%s290 + $0x20] sm:$0xff]
        %v385 = vld [vmem:[%s290 + $0x28] sm:$0xff]
        %v386 = vld [vmem:[%s290 + $0x30] sm:$0xff]
        %v387 = vld [vmem:[%s290 + $0x38] sm:$0xff]
        %v388 = vld [vmem:[%s290 + $0x40] sm:$0xff]
        %v389 = vld [vmem:[%s290 + $0x48] sm:$0xff]
        %v390 = vld [vmem:[%s290 + $0x50] sm:$0xff]
        %v391 = vld [vmem:[%s290 + $0x58] sm:$0xff]
        %v392 = vld [vmem:[%s290 + $0x60] sm:$0xff]
        %v393 = vld [vmem:[%s290 + $0x68] sm:$0xff]
        %v394 = vld [vmem:[%s290 + $0x70] sm:$0xff]
        %v395 = vld [vmem:[%s290 + $0x78] sm:$0xff]
        %v396 = vld [vmem:[%s290 + $0x80] sm:$0xff]
        %v397 = vld [vmem:[%s290 + $0x88] sm:$0xff]
        %v398 = vld [vmem:[%s290 + $0x90] sm:$0xff]
        %v399 = vld [vmem:[%s290 + $0x98] sm:$0xff]
        %v400 = vld [vmem:[%s290 + $0xa0] sm:$0xff]
        %v401 = vld [vmem:[%s290 + $0xa8] sm:$0xff]
        %v402 = vld [vmem:[%s290 + $0xb0] sm:$0xff]
        %v403 = vld [vmem:[%s290 + $0xb8] sm:$0xff]
        %v404 = vld [vmem:[%s290 + $0xc0] sm:$0xff]
        %v405 = vld [vmem:[%s290 + $0xc8] sm:$0xff]
        %v406 = vld [vmem:[%s290 + $0xd0] sm:$0xff]
        %v407 = vld [vmem:[%s290 + $0xd8] sm:$0xff]
        %v408 = vld [vmem:[%s290 + $0xe0] sm:$0xff]
        %v409 = vld [vmem:[%s290 + $0xe8] sm:$0xff]
        %v410 = vld [vmem:[%s290 + $0xf0] sm:$0xff]
        %v411 = vld [vmem:[%s290 + $0xf8] sm:$0xff]
        %v412 = vmul.f32 %v380, 0.25
        %v413 = vmul.f32 %v381, 0.25
        %v414 = vmul.f32 %v382, 0.25
        %v415 = vmul.f32 %v383, 0.25
        %v416 = vmul.f32 %v384, 0.25
        %v417 = vmul.f32 %v385, 0.25
        %v418 = vmul.f32 %v386, 0.25
        %v419 = vmul.f32 %v387, 0.25
        %v420 = vmul.f32 %v388, 0.25
        %v421 = vmul.f32 %v389, 0.25
        %v422 = vmul.f32 %v390, 0.25
        %v423 = vmul.f32 %v391, 0.25
        %v424 = vmul.f32 %v392, 0.25
        %v425 = vmul.f32 %v393, 0.25
        %v426 = vmul.f32 %v394, 0.25
        %v427 = vmul.f32 %v395, 0.25
        %v428 = vmul.f32 %v396, 0.25
        %v429 = vmul.f32 %v397, 0.25
        %v430 = vmul.f32 %v398, 0.25
        %v431 = vmul.f32 %v399, 0.25
        %v432 = vmul.f32 %v400, 0.25
        %v433 = vmul.f32 %v401, 0.25
        %v434 = vmul.f32 %v402, 0.25
        %v435 = vmul.f32 %v403, 0.25
        %v436 = vmul.f32 %v404, 0.25
        %v437 = vmul.f32 %v405, 0.25
        %v438 = vmul.f32 %v406, 0.25
        %v439 = vmul.f32 %v407, 0.25
        %v440 = vmul.f32 %v408, 0.25
        %v441 = vmul.f32 %v409, 0.25
        %v442 = vmul.f32 %v410, 0.25
        %v443 = vmul.f32 %v411, 0.25
        %444 = vst [vmem:[%s340 + $0x20] sm:$0xff] %v412
        %445 = vst [vmem:[%s340 + $0x28] sm:$0xff] %v413
        %446 = vst [vmem:[%s340 + $0x30] sm:$0xff] %v414
        %447 = vst [vmem:[%s340 + $0x38] sm:$0xff] %v415
        %448 = vst [vmem:[%s340 + $0x40] sm:$0xff] %v416
        %449 = vst [vmem:[%s340 + $0x48] sm:$0xff] %v417
        %450 = vst [vmem:[%s340 + $0x50] sm:$0xff] %v418
        %451 = vst [vmem:[%s340 + $0x58] sm:$0xff] %v419
        %452 = vst [vmem:[%s340 + $0x60] sm:$0xff] %v420
        %453 = vst [vmem:[%s340 + $0x68] sm:$0xff] %v421
        %454 = vst [vmem:[%s340 + $0x70] sm:$0xff] %v422
        %455 = vst [vmem:[%s340 + $0x78] sm:$0xff] %v423
        %456 = vst [vmem:[%s340 + $0x80] sm:$0xff] %v424
        %457 = vst [vmem:[%s340 + $0x88] sm:$0xff] %v425
        %458 = vst [vmem:[%s340 + $0x90] sm:$0xff] %v426
        %459 = vst [vmem:[%s340 + $0x98] sm:$0xff] %v427
        %460 = vst [vmem:[%s340 + $0xc8] sm:$0xff] %v428
        %461 = vst [vmem:[%s340 + $0xd0] sm:$0xff] %v429
        %462 = vst [vmem:[%s340 + $0xd8] sm:$0xff] %v430
        %463 = vst [vmem:[%s340 + $0xe0] sm:$0xff] %v431
        %464 = vst [vmem:[%s340 + $0xe8] sm:$0xff] %v432
        %465 = vst [vmem:[%s340 + $0xf0] sm:$0xff] %v433
        %466 = vst [vmem:[%s340 + $0xf8] sm:$0xff] %v434
        %467 = vst [vmem:[%s340 + $0x100] sm:$0xff] %v435
        %468 = vst [vmem:[%s340 + $0x108] sm:$0xff] %v436
        %469 = vst [vmem:[%s340 + $0x110] sm:$0xff] %v437
        %470 = vst [vmem:[%s340 + $0x118] sm:$0xff] %v438
        %471 = vst [vmem:[%s340 + $0x120] sm:$0xff] %v439
        %472 = vst [vmem:[%s340 + $0x128] sm:$0xff] %v440
        %473 = vst [vmem:[%s340 + $0x130] sm:$0xff] %v441
        %474 = vst [vmem:[%s340 + $0x138] sm:$0xff] %v442
        %475 = vst [vmem:[%s340 + $0x140] sm:$0xff] %v443
        %v476 = vld [vmem:[%s300] sm:$0xff]
        %v477 = vld [vmem:[%s300 + $0x8] sm:$0xff]
        %v478 = vld [vmem:[#allocation8] sm:$0xff]
        %v479 = vld [vmem:[#allocation8 + $0x8] sm:$0xff]
        %v480 = vld [vmem:[#allocation8 + $0x10] sm:$0xff]
        %v481 = vld [vmem:[#allocation8 + $0x18] sm:$0xff]
        %v482 = vld [vmem:[#allocation8 + $0x20] sm:$0xff]
        %v483 = vld [vmem:[#allocation8 + $0x28] sm:$0xff]
        %v484 = vld [vmem:[#allocation8 + $0x30] sm:$0xff]
        %v485 = vld [vmem:[#allocation8 + $0x38] sm:$0xff]
        %v486 = vld [vmem:[#allocation8 + $0x40] sm:$0xff]
        %v487 = vld [vmem:[#allocation8 + $0x48] sm:$0xff]
        %v488 = vld [vmem:[#allocation8 + $0x50] sm:$0xff]
        %v489 = vld [vmem:[#allocation8 + $0x58] sm:$0xff]
        %v490 = vld [vmem:[#allocation8 + $0x60] sm:$0xff]
        %v491 = vld [vmem:[#allocation8 + $0x68] sm:$0xff]
        %v492 = vld [vmem:[#allocation8 + $0x70] sm:$0xff]
        %v493 = vld [vmem:[#allocation8 + $0x78] sm:$0xff]
        %v494 = vlaneseq
        %v495 = vand.u32 %v494, 127
        %vm496 = vcmp.ge.s32.totalorder %v495, 60
        %v497 = vsel %vm496, %v476, 0.0
        %v498 = vsel %vm496, %v477, 0.0
        %499 = vmatpush.msra.mxu0 %v493
        %500 = vmatpush.msra.mxu0 %v492
        %501 = vmatpush.msra.mxu0 %v491
        %502 = vmatpush.msra.mxu0 %v490
        %503 = vmatpush.msra.mxu0 %v489
        %504 = vmatpush.msra.mxu0 %v488
        %505 = vmatpush.msra.mxu0 %v487
        %506 = vmatpush.msra.mxu0 %v486
        %507 = vmatpush.msra.mxu0 %v485
        %508 = vmatpush.msra.mxu0 %v484
        %509 = vmatpush.msra.mxu0 %v483
        %510 = vmatpush.msra.mxu0 %v482
        %511 = vmatpush.msra.mxu0 %v481
        %512 = vmatpush.msra.mxu0 %v480
        %513 = vmatpush.msra.mxu0 %v479
        %514 = vmatpush.msra.mxu0 %v478
        %515 = vmatmul.f32.gmra.mxu0 %v476
        %v516 = vpop.f32.mrf.mxu0
        %v517 = vadd.f32 %v497, %v516
        %518 = vmatmul.f32.gmra.mxu0 %v477
        %v519 = vpop.f32.mrf.mxu0
        %v520 = vadd.f32 %v498, %v519
        %521 = vdwg.mxu0
        %v522 = vmul.f32 %v517, 4.0
        %v523 = vmul.f32 %v520, 4.0
        %vm524 = vcmask 982016
        %525 = vst.msk [vmem:[%s340 + $0xa0] sm:$0xff] %vm524, %v522
        %526 = vst.msk [vmem:[%s340 + $0x148] sm:$0xff] %vm524, %v523
        %s527 = sand.u32 %s132, 1
        %s528 = scalar_lea.sflag [#allocation4], %s527
        %s529 = sand.u32 %s132, 1
        %s530 = smul.addr %s529, 336
        %s531 = scalar_lea.vmem [#allocation10], %s530
        // Predicated region
        $region53: #{tpu_custom_call.1} parent=35 // pred_check
          %p532 = pneg %p142
        $region54: #{tpu_custom_call.1} parent=35 // pred_check_branch
          %534 = sbr.rel (%p532) target = $region56
        $region55: #{tpu_custom_call.1} parent=35 // pred_region
          %s535 = smul.u32 2, %s25
          %s536 = ssub.s32 3, %s535
          %p537 = scmp.lt.s32.totalorder %s536, 2
          %s538 = scalar_select %p537, %s536, 2
          %s539 = smul.u32 8, %s538
          %s540 = smul.u32 %s539, 21
          %s541 = ssub.s32 336, %s540
          %s542 = sshll.u32 %s541, 4
          %543 = vsyncadd %s528, %s542
          %p544 = scmp.ne.s32.totalorder 0, %s540
          %s545 = smul.addr %s535, 21
          %s546 = smul.addr %s545, 8
          %s547 = scalar_lea.hbm %s4, %s546
          %s548 = smul.u32 168, %s538
          %s549 = sshll.u32 %s531, 4
          %s550 = int_to_ptr.vmem [resolvable:$true] %s549
          %s551 = sshll.u32 %s547, 4
          %s552 = int_to_ptr.hbm [resolvable:$true] %s551
          %s553 = sshll.u32 %s548, 4
          %557 = dma.vmem_to_hbm [thread:$0]  (%p544), %s550, %s553, %s552, %s528, 2688, 2688, 168
        $region56: #{tpu_custom_call.1} parent=35 // pred_fallthru
          _
      $region36: #{tpu_custom_call.1} parent=5 // pred_fallthru
        _
      %p558 = scmp.le.s32.totalorder 2, %s20
      // Predicated region
      $region57: #{tpu_custom_call.1} parent=5 // pred_check
        %p559 = pneg %p558
      $region58: #{tpu_custom_call.1} parent=5 // pred_check_branch
        %561 = sbr.rel (%p559) target = $region60
      $region59: #{tpu_custom_call.1} parent=5 // pred_region
        %s562 = ssub.s32 %s20, 2
        // Predicated region
        $region61: #{tpu_custom_call.1} parent=59 // pred_check
          %p563 = pneg %p148
        $region62: #{tpu_custom_call.1} parent=59 // pred_check_branch
          %565 = sbr.rel (%p563) target = $region64
        $region63: #{tpu_custom_call.1} parent=59 // pred_region
          %s566 = sand.u32 %s133, 1
          %s567 = scalar_lea.sflag [#allocation4], %s566
          %s568 = sand.u32 %s133, 1
          %s569 = smul.addr %s568, 336
          %s570 = scalar_lea.vmem [#allocation10], %s569
          %572 = dma.done %s567, 5376
        $region64: #{tpu_custom_call.1} parent=59 // pred_fallthru
          _
      $region60: #{tpu_custom_call.1} parent=5 // pred_fallthru
        _
    $region6: #{tpu_custom_call.1} parent=1 // loop_footer
      %s24 = sadd.s32 1, %s20
    $region7: #{tpu_custom_call.1} parent=1 // loop_footer_branch
      %19 = sbr.rel target = $region3
    $region8: #{tpu_custom_call.1} parent=1 // loop_exit
      _
    %573 = vsyncpa [#allocation3], 1
    %s574 = scalar_lea.sflag [#allocation3], 1
    %575 = vsyncpa %s574, 1
    %576 = vsyncpa [#allocation6], 1
    %s577 = scalar_lea.sflag [#allocation6], 1
    %578 = vsyncpa %s577, 1
    %579 = vsyncpa [#allocation9], 1
    %580 = vsyncpa [#allocation4], 1
    %s581 = scalar_lea.sflag [#allocation4], 1
    %582 = vsyncpa %s581, 1

</llo_original>
